<compile_context>
chip_gen: v7x
topology: tpu7x:2x2x1
jax: 0.10.0
libtpu: 0.0.40
codegen_flags: <defaults>
</compile_context>

<pallas_src>
import functools

import jax
import jax.numpy as jnp
from jax.experimental import pallas as pl
from jax.experimental.pallas import tpu as pltpu


def _round_up(x, m):
    return (x + m - 1) // m * m


def _pick_tile(desired, total, align):
    """Largest multiple of `align` <= desired that divides `total`.

    Falls back to `total` itself (full-extent blocks are always legal).
    """
    if desired >= total:
        return total
    t = (desired // align) * align
    while t >= align:
        if total % t == 0:
            return t
        t -= align
    return total


def _inner_product_decoder_kernel(z_row_ref, z_col_ref, out_ref, *, resident):
    """One (tm, tn) tile of sigmoid(z @ z.T).

    z_row_ref: (tm, D)                       rows of z for this stripe
    z_col_ref: (nj, D, tn) if resident       whole z, lane-dense along tn
               (1,  D, tn) otherwise         just column block j
    """
    jblk = pl.program_id(1) if resident else 0
    z_col = z_col_ref[jblk]  # (D, tn), lane-dense along tn -> feeds MXU directly
    prod = jnp.dot(z_row_ref[...], z_col, preferred_element_type=jnp.float32)
    out_ref[...] = jax.nn.sigmoid(prod).astype(out_ref.dtype)


@functools.partial(
    jax.jit,
    static_argnames=("dropout_rate", "training", "tm", "tn", "out_dtype",
                     "max_resident_bytes"),
)
def inner_product_decoder(
    z,
    dropout_key=None,
    *,
    dropout_rate=0.0,
    training=False,
    tm=512,
    tn=1024,
    out_dtype=None,
    max_resident_bytes=4 << 20,
):
    """adj = sigmoid(z @ z.T), z: (N, D).

    Eval mode by default (dropout is identity). Training-mode dropout is applied
    in the wrapper (O(N*D) elementwise, negligible vs the N^2 kernel).
    out_dtype=jnp.bfloat16 halves the dominant HBM writeback (recommended on v5e).
    """
    N, D = z.shape
    out_dtype = z.dtype if out_dtype is None else out_dtype
    itemsize_in = jnp.dtype(z.dtype).itemsize
    itemsize_out = jnp.dtype(out_dtype).itemsize

    if training and dropout_rate > 0.0:
        if dropout_key is None:
            raise ValueError("dropout_key required when training with dropout_rate > 0")
        keep = jax.random.bernoulli(dropout_key, 1.0 - dropout_rate, z.shape)
        z = jnp.where(keep, z / (1.0 - dropout_rate), 0.0).astype(z.dtype)
        # TODO(synk): jax RNG cannot bit-match torch's F.dropout mask, only its distribution.

    # Pad N up to a multiple of 128 so output tiles satisfy the (8, 128) rule
    # for arbitrary node counts; padded rows/cols are sliced off at the end.
    Np = _round_up(N, 128)
    if Np != N:
        z = jnp.pad(z, ((0, Np - N), (0, 0)))

    tm = _pick_tile(tm, Np, 8)      # sublane-aligned row tile
    tn = _pick_tile(tn, Np, 128)    # lane-aligned column tile
    nj = Np // tn
    grid = (Np // tm, Np // tn)     # j innermost -> row tile constant per i sweep

    # Column operand, lane-dense along tn: z_col3[j, d, t] = z[j*tn + t, d].
    z_col3 = z.reshape(nj, tn, D).transpose(0, 2, 1)

    # Keep the whole column operand resident in VMEM when small: one DMA total
    # instead of re-reading it once per row stripe.
    resident = (Np * D * itemsize_in) <= max_resident_bytes
    if resident:
        col_spec = pl.BlockSpec((nj, D, tn), lambda i, j: (0, 0, 0))
        col_read_bytes = Np * D * itemsize_in
    else:
        col_spec = pl.BlockSpec((1, D, tn), lambda i, j: (j, 0, 0))
        col_read_bytes = Np * D * itemsize_in * (Np // tm)

    cost = pl.CostEstimate(
        flops=2 * Np * Np * D,
        transcendentals=Np * Np,                      # sigmoid exp
        bytes_accessed=Np * Np * itemsize_out         # adjacency writeback (dominant)
        + Np * D * itemsize_in                        # row operand, read once
        + col_read_bytes,                             # column operand
    )

    # VMEM budget: double-buffered tiles (+ resident z), 2x headroom; raise
    # above v5e's 16 MiB scoped default, cap at v7x's 64 MiB physical.
    lhs_vmem = 2 * tm * _round_up(D, 128) * itemsize_in
    col_vmem = 2 * _round_up(D, 8) * (Np if resident else tn) * itemsize_in
    out_vmem = 2 * tm * tn * itemsize_out
    vmem_limit = int(min(64 << 20, max(32 << 20, 2 * (lhs_vmem + col_vmem + out_vmem))))

    adj = pl.pallas_call(
        functools.partial(_inner_product_decoder_kernel, resident=resident),
        out_shape=jax.ShapeDtypeStruct((Np, Np), out_dtype),
        grid_spec=pltpu.PrefetchScalarGridSpec(
            num_scalar_prefetch=0,
            grid=grid,
            in_specs=[
                pl.BlockSpec((tm, D), lambda i, j: (i, 0)),  # rows of z
                col_spec,                                    # z.T columns, lane-dense
            ],
            out_specs=pl.BlockSpec((tm, tn), lambda i, j: (i, j)),
        ),
        compiler_params=pltpu.CompilerParams(
            dimension_semantics=("parallel", "parallel"),
            vmem_limit_bytes=vmem_limit,
        ),
        cost_estimate=cost,
    )(z, z_col3)
    # NOTE: out_specs pipeline_mode=pl.Buffered(3) is a cheap follow-up sweep
    # (keeps the write queue full across grid steps); left at the default here.

    if Np != N:
        adj = adj[:N, :N]
    return adj


if __name__ == "__main__":
    key = jax.random.PRNGKey(0)
    N, D = 256, 32  # small node count / latent dim typical of a GAE decoder
    z = jax.random.normal(key, (N, D), dtype=jnp.float32)
    ref = jax.nn.sigmoid(z @ z.T)

    # Default path: whole z resident in VMEM, f32 output (exact torch parity).
    adj = inner_product_decoder(z)
    jax.block_until_ready(adj)
    assert adj.shape == (N, N) and adj.dtype == z.dtype
    assert jnp.allclose(adj, ref, atol=1e-5, rtol=1e-5)

    # Tiled (non-resident) column path.
    adj_t = inner_product_decoder(z, max_resident_bytes=0)
    jax.block_until_ready(adj_t)
    assert jnp.allclose(adj_t, ref, atol=1e-5, rtol=1e-5)

    # Node count that does not divide the tiles -> exercises padding path.
    N2 = 200
    z2 = z[:N2]
    adj2 = inner_product_decoder(z2)
    jax.block_until_ready(adj2)
    assert adj2.shape == (N2, N2)
    assert jnp.allclose(adj2, jax.nn.sigmoid(z2 @ z2.T), atol=1e-5, rtol=1e-5)

    # bf16 adjacency halves the dominant HBM writeback (biggest win on v5e).
    adj_bf16 = inner_product_decoder(z, out_dtype=jnp.bfloat16)
    jax.block_until_ready(adj_bf16)
    assert adj_bf16.dtype == jnp.bfloat16
    assert jnp.allclose(adj_bf16.astype(jnp.float32), ref, atol=2e-2, rtol=2e-2)

    print("KERNEL_OK")
</pallas_src>

<mosaic_0001>
module attributes {stable_mosaic.version = 11 : i64} {
  func.func @_inner_product_decoder_kernel(%arg0: i32, %arg1: i32, %arg2: memref<256x32xf32, #tpu.memory_space<vmem>>, %arg3: memref<1x32x256xf32, #tpu.memory_space<vmem>>, %arg4: memref<256x256xf32, #tpu.memory_space<vmem>>) attributes {dimension_semantics = [#tpu.dimension_semantics<parallel>, #tpu.dimension_semantics<parallel>], iteration_bounds = array<i64: 1, 1>, scalar_prefetch = 0 : i64, scratch_operands = 0 : i64, tpu.core_type = #tpu.core_type<tc>, window_params = [{transform_indices = @transform_0, window_bounds = array<i64: 256, 32>}, {pipeline_mode = #tpu.pipeline_mode<synchronous>, transform_indices = @transform_1, window_bounds = array<i64: 1, 32, 256>}, {transform_indices = @transform_2, window_bounds = array<i64: 256, 256>}]} {
    %0 = arith.index_cast %arg1 : i32 to index
    %c0 = arith.constant 0 : index
    %c0_0 = arith.constant 0 : index
    %1 = vector.load %arg3[%0, %c0, %c0_0] : memref<1x32x256xf32, #tpu.memory_space<vmem>>, vector<1x32x256xf32>
    %2 = vector.shape_cast %1 : vector<1x32x256xf32> to vector<32x256xf32>
    %c0_1 = arith.constant 0 : index
    %c0_2 = arith.constant 0 : index
    %3 = vector.load %arg2[%c0_1, %c0_2] : memref<256x32xf32, #tpu.memory_space<vmem>>, vector<256x32xf32>
    %cst = arith.constant dense<0.000000e+00> : vector<256x256xf32>
    %4 = tpu.matmul %3, %2, %cst {dimension_numbers = #tpu.dot_dimension_numbers<[1], [0], [0], [1], [0, 0, 1, 1], [], []>} : vector<256x32xf32>, vector<32x256xf32>, vector<256x256xf32> -> vector<256x256xf32>
    %5 = arith.negf %4 : vector<256x256xf32>
    %6 = math.exp %5 : vector<256x256xf32>
    %cst_3 = arith.constant 1.000000e+00 : f32
    %7 = vector.broadcast %cst_3 : f32 to vector<256x256xf32>
    %8 = arith.addf %7, %6 : vector<256x256xf32>
    %9 = arith.divf %7, %8 : vector<256x256xf32>
    %c0_4 = arith.constant 0 : index
    %c0_5 = arith.constant 0 : index
    %10 = vector.load %arg4[%c0_4, %c0_5] : memref<256x256xf32, #tpu.memory_space<vmem>>, vector<256x256xf32>
    tpu.vector_store %arg4[%c0_4, %c0_5], %9 {strides = array<i32>} : memref<256x256xf32, #tpu.memory_space<vmem>>, vector<256x256xf32>,
    return
  }
  func.func @transform_0(%arg0: i32, %arg1: i32) -> (i32, i32) {
    %c0_i32 = arith.constant 0 : i32
    %c0_i32_0 = arith.constant 0 : i32
    return %arg0, %c0_i32 : i32, i32
  }
  func.func @transform_1(%arg0: i32, %arg1: i32) -> (i32, i32, i32) {
    %c0_i32 = arith.constant 0 : i32
    %c0_i32_0 = arith.constant 0 : i32
    %c0_i32_1 = arith.constant 0 : i32
    %c0_i32_2 = arith.constant 0 : i32
    return %c0_i32, %c0_i32_0, %c0_i32_1 : i32, i32, i32
  }
  func.func @transform_2(%arg0: i32, %arg1: i32) -> (i32, i32) {
    %c0_i32 = arith.constant 0 : i32
    return %arg0, %arg1 : i32, i32
  }
}

</mosaic_0001>

<llo_original>
// kernel: inner_product_decoder.1
$region0: #{inner_product_decoder.1}
  #allocation0 [shape = 'u32[]', space=smem, size = 0x4, offset = 0x4, fixed_abs, tag = 'smem constant byte address 0x4 - core index']
  #allocation1 [shape = 'u32[144,128]{1,0:T(1,128)}', space=vmem, size = 0x12000, scoped, tag = 'internal scratch']
  %s0 = inlined_call_operand.vmem [shape: f32[256,32], index: 0, kind: input, shape index: {}]
  %s1 = inlined_call_operand.vmem [shape: f32[1,32,256], index: 1, kind: input, shape index: {}]
  %s2 = inlined_call_operand.hbm [shape: f32[256,256], index: 2, kind: output, shape index: {}]
  %s3 = sld [smem:[#allocation0]]
  $region18: #{inner_product_decoder.1} parent=0
    _
  %s5 = ssub.s32 1, %s3
  %s6 = scalar_select 0, %s5, %s3
  $region1: #{inner_product_decoder.1} parent=0
    #allocation2 [shape = 'u8[262144]{0}', space=vmem, size = 0x40000, scoped, tag = 'output window, operand 0, single buffered']
    #allocation3 [shape = 's32[1]{0}', space=sflag, size = 0x4, scoped, tag = 'scoped memory for inner_product_decoder.1']
    %7 = vsyncpa [#allocation3], 0
    // Predicated region
    $region2: #{inner_product_decoder.1} parent=1 // pred_check
      _
    $region3: #{inner_product_decoder.1} parent=1 // pred_check_branch
      %9 = sbr.rel (0) target = $region5
    $region4: #{inner_product_decoder.1} parent=1 // pred_region
      _
    $region5: #{inner_product_decoder.1} parent=1 // pred_fallthru
      _
    // Predicated region
    $region6: #{inner_product_decoder.1} parent=1 // pred_check
      _
    $region7: #{inner_product_decoder.1} parent=1 // pred_check_branch
      %11 = sbr.rel (0) target = $region9
    $region8: #{inner_product_decoder.1} parent=1 // pred_region
      _
    $region9: #{inner_product_decoder.1} parent=1 // pred_fallthru
      _
    %s12 = smul.u32 0, 8
    %s13 = smul.addr %s12, 8
    %s14 = scalar_lea.vmem %s1, %s13
    %v15 = vld [vmem:[%s14] sm:$0xff]
    %v16 = vld [vmem:[%s14 + $0x8] sm:$0xff]
    %v17 = vld [vmem:[%s14 + $0x10] sm:$0xff]
    %v18 = vld [vmem:[%s14 + $0x18] sm:$0xff]
    %v19 = vld [vmem:[%s14 + $0x20] sm:$0xff]
    %v20 = vld [vmem:[%s14 + $0x28] sm:$0xff]
    %v21 = vld [vmem:[%s14 + $0x30] sm:$0xff]
    %v22 = vld [vmem:[%s14 + $0x38] sm:$0xff]
    %v23 = vld [vmem:[%s0] sm:$0xff]
    %v24 = vld [vmem:[%s0 + $0x8] sm:$0xff]
    %v25 = vld [vmem:[%s0 + $0x10] sm:$0xff]
    %v26 = vld [vmem:[%s0 + $0x18] sm:$0xff]
    %v27 = vld [vmem:[%s0 + $0x20] sm:$0xff]
    %v28 = vld [vmem:[%s0 + $0x28] sm:$0xff]
    %v29 = vld [vmem:[%s0 + $0x30] sm:$0xff]
    %v30 = vld [vmem:[%s0 + $0x38] sm:$0xff]
    %v31 = vld [vmem:[%s0 + $0x40] sm:$0xff]
    %v32 = vld [vmem:[%s0 + $0x48] sm:$0xff]
    %v33 = vld [vmem:[%s0 + $0x50] sm:$0xff]
    %v34 = vld [vmem:[%s0 + $0x58] sm:$0xff]
    %v35 = vld [vmem:[%s0 + $0x60] sm:$0xff]
    %v36 = vld [vmem:[%s0 + $0x68] sm:$0xff]
    %v37 = vld [vmem:[%s0 + $0x70] sm:$0xff]
    %v38 = vld [vmem:[%s0 + $0x78] sm:$0xff]
    %v39 = vld [vmem:[%s0 + $0x80] sm:$0xff]
    %v40 = vld [vmem:[%s0 + $0x88] sm:$0xff]
    %v41 = vld [vmem:[%s0 + $0x90] sm:$0xff]
    %v42 = vld [vmem:[%s0 + $0x98] sm:$0xff]
    %v43 = vld [vmem:[%s0 + $0xa0] sm:$0xff]
    %v44 = vld [vmem:[%s0 + $0xa8] sm:$0xff]
    %v45 = vld [vmem:[%s0 + $0xb0] sm:$0xff]
    %v46 = vld [vmem:[%s0 + $0xb8] sm:$0xff]
    %v47 = vld [vmem:[%s0 + $0xc0] sm:$0xff]
    %v48 = vld [vmem:[%s0 + $0xc8] sm:$0xff]
    %v49 = vld [vmem:[%s0 + $0xd0] sm:$0xff]
    %v50 = vld [vmem:[%s0 + $0xd8] sm:$0xff]
    %v51 = vld [vmem:[%s0 + $0xe0] sm:$0xff]
    %v52 = vld [vmem:[%s0 + $0xe8] sm:$0xff]
    %v53 = vld [vmem:[%s0 + $0xf0] sm:$0xff]
    %v54 = vld [vmem:[%s0 + $0xf8] sm:$0xff]
    %vm55 = vcmask 261120
    %v57 = vsel %vm55, %v23, 0
    %v60 = vsel %vm55, %v24, 0
    %v63 = vsel %vm55, %v25, 0
    %v66 = vsel %vm55, %v26, 0
    %v69 = vsel %vm55, %v27, 0
    %v72 = vsel %vm55, %v28, 0
    %v75 = vsel %vm55, %v29, 0
    %v78 = vsel %vm55, %v30, 0
    %v81 = vsel %vm55, %v31, 0
    %v84 = vsel %vm55, %v32, 0
    %v87 = vsel %vm55, %v33, 0
    %v90 = vsel %vm55, %v34, 0
    %v93 = vsel %vm55, %v35, 0
    %v96 = vsel %vm55, %v36, 0
    %v99 = vsel %vm55, %v37, 0
    %v102 = vsel %vm55, %v38, 0
    %v105 = vsel %vm55, %v39, 0
    %v108 = vsel %vm55, %v40, 0
    %v111 = vsel %vm55, %v41, 0
    %v114 = vsel %vm55, %v42, 0
    %v117 = vsel %vm55, %v43, 0
    %v120 = vsel %vm55, %v44, 0
    %v123 = vsel %vm55, %v45, 0
    %v126 = vsel %vm55, %v46, 0
    %v129 = vsel %vm55, %v47, 0
    %v132 = vsel %vm55, %v48, 0
    %v135 = vsel %vm55, %v49, 0
    %v138 = vsel %vm55, %v50, 0
    %v141 = vsel %vm55, %v51, 0
    %v144 = vsel %vm55, %v52, 0
    %v147 = vsel %vm55, %v53, 0
    %v150 = vsel %vm55, %v54, 0
    %152 = vmatprep.subr.mxu0 %v16
    %153 = vmatpush1.msra.mxu0 %v15
    %154 = vmatprep.subr.mxu0 %v18
    %155 = vmatpush1.msra.mxu0 %v17
    %156 = vmatprep.subr.mxu0 %v20
    %157 = vmatpush1.msra.mxu0 %v19
    %158 = vmatprep.subr.mxu0 %v22
    %159 = vmatpush1.msra.mxu0 %v21
    %160 = vmatprep.subr.mxu0 0.0
    %161 = vmatpush1.msra.mxu0 0.0
    %162 = vmatprep.subr.mxu0 0.0
    %163 = vmatpush1.msra.mxu0 0.0
    %164 = vmatprep.subr.mxu0 0.0
    %165 = vmatpush1.msra.mxu0 0.0
    %166 = vmatprep.subr.mxu0 0.0
    %167 = vmatpush1.msra.mxu0 0.0
    %168 = vmatprep.subr.mxu0 0.0
    %169 = vmatpush1.msra.mxu0 0.0
    %170 = vmatprep.subr.mxu0 0.0
    %171 = vmatpush1.msra.mxu0 0.0
    %172 = vmatprep.subr.mxu0 0.0
    %173 = vmatpush1.msra.mxu0 0.0
    %174 = vmatprep.subr.mxu0 0.0
    %175 = vmatpush1.msra.mxu0 0.0
    %176 = vmatprep.subr.mxu0 0.0
    %177 = vmatpush1.msra.mxu0 0.0
    %178 = vmatprep.subr.mxu0 0.0
    %179 = vmatpush1.msra.mxu0 0.0
    %180 = vmatprep.subr.mxu0 0.0
    %181 = vmatpush1.msra.mxu0 0.0
    %182 = vmatprep.subr.mxu0 0.0
    %183 = vmatpush1.msra.mxu0 0.0
    %184 = vmatprep.subr.mxu0 0.0
    %185 = vmatpush1.msra.mxu0 0.0
    %186 = vmatprep.subr.mxu0 0.0
    %187 = vmatpush1.msra.mxu0 0.0
    %188 = vmatprep.subr.mxu0 0.0
    %189 = vmatpush1.msra.mxu0 0.0
    %190 = vmatprep.subr.mxu0 0.0
    %191 = vmatpush1.msra.mxu0 0.0
    %192 = vmatprep.subr.mxu0 0.0
    %193 = vmatpush1.msra.mxu0 0.0
    %194 = vmatprep.subr.mxu0 0.0
    %195 = vmatpush1.msra.mxu0 0.0
    %196 = vmatprep.subr.mxu0 0.0
    %197 = vmatpush1.msra.mxu0 0.0
    %198 = vmatprep.subr.mxu0 0.0
    %199 = vmatpush1.msra.mxu0 0.0
    %200 = vmatprep.subr.mxu0 0.0
    %201 = vmatpush1.msra.mxu0 0.0
    %202 = vmatprep.subr.mxu0 0.0
    %203 = vmatpush1.msra.mxu0 0.0
    %204 = vmatprep.subr.mxu0 0.0
    %205 = vmatpush1.msra.mxu0 0.0
    %206 = vmatprep.subr.mxu0 0.0
    %207 = vmatpush1.msra.mxu0 0.0
    %208 = vmatprep.subr.mxu0 0.0
    %209 = vmatpush1.msra.mxu0 0.0
    %210 = vmatprep.subr.mxu0 0.0
    %211 = vmatpush1.msra.mxu0 0.0
    %212 = vmatprep.subr.mxu0 0.0
    %213 = vmatpush1.msra.mxu0 0.0
    %214 = vmatprep.subr.mxu0 0.0
    %215 = vmatpush1.msra.mxu0 0.0
    %216 = vmatprep.mubr.f32.mxu0 0.0
    %217 = vmatmul.mubr.f32.gmra.mrb[0].mxu0 %v57
    %v218 = vpop.f32.mrb[0].mxu0
    %v219 = vadd.f32 0.0, %v218
    %v220 = vpop.f32.mrb[0].mxu0
    %v221 = vadd.f32 0.0, %v220
    %222 = vmatprep.mubr.f32.mxu0 0.0
    %223 = vmatmul.mubr.f32.gmra.mrb[0].mxu0 %v60
    %v224 = vpop.f32.mrb[0].mxu0
    %v225 = vadd.f32 0.0, %v224
    %v226 = vpop.f32.mrb[0].mxu0
    %v227 = vadd.f32 0.0, %v226
    %228 = vmatprep.mubr.f32.mxu0 0.0
    %229 = vmatmul.mubr.f32.gmra.mrb[0].mxu0 %v63
    %v230 = vpop.f32.mrb[0].mxu0
    %v231 = vadd.f32 0.0, %v230
    %v232 = vpop.f32.mrb[0].mxu0
    %v233 = vadd.f32 0.0, %v232
    %234 = vmatprep.mubr.f32.mxu0 0.0
    %235 = vmatmul.mubr.f32.gmra.mrb[0].mxu0 %v66
    %v236 = vpop.f32.mrb[0].mxu0
    %v237 = vadd.f32 0.0, %v236
    %v238 = vpop.f32.mrb[0].mxu0
    %v239 = vadd.f32 0.0, %v238
    %240 = vmatprep.mubr.f32.mxu0 0.0
    %241 = vmatmul.mubr.f32.gmra.mrb[0].mxu0 %v69
    %v242 = vpop.f32.mrb[0].mxu0
    %v243 = vadd.f32 0.0, %v242
    %v244 = vpop.f32.mrb[0].mxu0
    %v245 = vadd.f32 0.0, %v244
    %246 = vmatprep.mubr.f32.mxu0 0.0
    %247 = vmatmul.mubr.f32.gmra.mrb[0].mxu0 %v72
    %v248 = vpop.f32.mrb[0].mxu0
    %v249 = vadd.f32 0.0, %v248
    %v250 = vpop.f32.mrb[0].mxu0
    %v251 = vadd.f32 0.0, %v250
    %252 = vmatprep.mubr.f32.mxu0 0.0
    %253 = vmatmul.mubr.f32.gmra.mrb[0].mxu0 %v75
    %v254 = vpop.f32.mrb[0].mxu0
    %v255 = vadd.f32 0.0, %v254
    %v256 = vpop.f32.mrb[0].mxu0
    %v257 = vadd.f32 0.0, %v256
    %258 = vmatprep.mubr.f32.mxu0 0.0
    %259 = vmatmul.mubr.f32.gmra.mrb[0].mxu0 %v78
    %v260 = vpop.f32.mrb[0].mxu0
    %v261 = vadd.f32 0.0, %v260
    %v262 = vpop.f32.mrb[0].mxu0
    %v263 = vadd.f32 0.0, %v262
    %264 = vmatprep.mubr.f32.mxu0 0.0
    %265 = vmatmul.mubr.f32.gmra.mrb[0].mxu0 %v81
    %v266 = vpop.f32.mrb[0].mxu0
    %v267 = vadd.f32 0.0, %v266
    %v268 = vpop.f32.mrb[0].mxu0
    %v269 = vadd.f32 0.0, %v268
    %270 = vmatprep.mubr.f32.mxu0 0.0
    %271 = vmatmul.mubr.f32.gmra.mrb[0].mxu0 %v84
    %v272 = vpop.f32.mrb[0].mxu0
    %v273 = vadd.f32 0.0, %v272
    %v274 = vpop.f32.mrb[0].mxu0
    %v275 = vadd.f32 0.0, %v274
    %276 = vmatprep.mubr.f32.mxu0 0.0
    %277 = vmatmul.mubr.f32.gmra.mrb[0].mxu0 %v87
    %v278 = vpop.f32.mrb[0].mxu0
    %v279 = vadd.f32 0.0, %v278
    %v280 = vpop.f32.mrb[0].mxu0
    %v281 = vadd.f32 0.0, %v280
    %282 = vmatprep.mubr.f32.mxu0 0.0
    %283 = vmatmul.mubr.f32.gmra.mrb[0].mxu0 %v90
    %v284 = vpop.f32.mrb[0].mxu0
    %v285 = vadd.f32 0.0, %v284
    %v286 = vpop.f32.mrb[0].mxu0
    %v287 = vadd.f32 0.0, %v286
    %288 = vmatprep.mubr.f32.mxu0 0.0
    %289 = vmatmul.mubr.f32.gmra.mrb[0].mxu0 %v93
    %v290 = vpop.f32.mrb[0].mxu0
    %v291 = vadd.f32 0.0, %v290
    %v292 = vpop.f32.mrb[0].mxu0
    %v293 = vadd.f32 0.0, %v292
    %294 = vmatprep.mubr.f32.mxu0 0.0
    %295 = vmatmul.mubr.f32.gmra.mrb[0].mxu0 %v96
    %v296 = vpop.f32.mrb[0].mxu0
    %v297 = vadd.f32 0.0, %v296
    %v298 = vpop.f32.mrb[0].mxu0
    %v299 = vadd.f32 0.0, %v298
    %300 = vmatprep.mubr.f32.mxu0 0.0
    %301 = vmatmul.mubr.f32.gmra.mrb[0].mxu0 %v99
    %v302 = vpop.f32.mrb[0].mxu0
    %v303 = vadd.f32 0.0, %v302
    %v304 = vpop.f32.mrb[0].mxu0
    %v305 = vadd.f32 0.0, %v304
    %306 = vmatprep.mubr.f32.mxu0 0.0
    %307 = vmatmul.mubr.f32.gmra.mrb[0].mxu0 %v102
    %v308 = vpop.f32.mrb[0].mxu0
    %v309 = vadd.f32 0.0, %v308
    %v310 = vpop.f32.mrb[0].mxu0
    %v311 = vadd.f32 0.0, %v310
    %312 = vmatprep.mubr.f32.mxu0 0.0
    %313 = vmatmul.mubr.f32.gmra.mrb[0].mxu0 %v105
    %v314 = vpop.f32.mrb[0].mxu0
    %v315 = vadd.f32 0.0, %v314
    %v316 = vpop.f32.mrb[0].mxu0
    %v317 = vadd.f32 0.0, %v316
    %318 = vmatprep.mubr.f32.mxu0 0.0
    %319 = vmatmul.mubr.f32.gmra.mrb[0].mxu0 %v108
    %v320 = vpop.f32.mrb[0].mxu0
    %v321 = vadd.f32 0.0, %v320
    %v322 = vpop.f32.mrb[0].mxu0
    %v323 = vadd.f32 0.0, %v322
    %324 = vmatprep.mubr.f32.mxu0 0.0
    %325 = vmatmul.mubr.f32.gmra.mrb[0].mxu0 %v111
    %v326 = vpop.f32.mrb[0].mxu0
    %v327 = vadd.f32 0.0, %v326
    %v328 = vpop.f32.mrb[0].mxu0
    %v329 = vadd.f32 0.0, %v328
    %330 = vmatprep.mubr.f32.mxu0 0.0
    %331 = vmatmul.mubr.f32.gmra.mrb[0].mxu0 %v114
    %v332 = vpop.f32.mrb[0].mxu0
    %v333 = vadd.f32 0.0, %v332
    %v334 = vpop.f32.mrb[0].mxu0
    %v335 = vadd.f32 0.0, %v334
    %336 = vmatprep.mubr.f32.mxu0 0.0
    %337 = vmatmul.mubr.f32.gmra.mrb[0].mxu0 %v117
    %v338 = vpop.f32.mrb[0].mxu0
    %v339 = vadd.f32 0.0, %v338
    %v340 = vpop.f32.mrb[0].mxu0
    %v341 = vadd.f32 0.0, %v340
    %342 = vmatprep.mubr.f32.mxu0 0.0
    %343 = vmatmul.mubr.f32.gmra.mrb[0].mxu0 %v120
    %v344 = vpop.f32.mrb[0].mxu0
    %v345 = vadd.f32 0.0, %v344
    %v346 = vpop.f32.mrb[0].mxu0
    %v347 = vadd.f32 0.0, %v346
    %348 = vmatprep.mubr.f32.mxu0 0.0
    %349 = vmatmul.mubr.f32.gmra.mrb[0].mxu0 %v123
    %v350 = vpop.f32.mrb[0].mxu0
    %v351 = vadd.f32 0.0, %v350
    %v352 = vpop.f32.mrb[0].mxu0
    %v353 = vadd.f32 0.0, %v352
    %354 = vmatprep.mubr.f32.mxu0 0.0
    %355 = vmatmul.mubr.f32.gmra.mrb[0].mxu0 %v126
    %v356 = vpop.f32.mrb[0].mxu0
    %v357 = vadd.f32 0.0, %v356
    %v358 = vpop.f32.mrb[0].mxu0
    %v359 = vadd.f32 0.0, %v358
    %360 = vmatprep.mubr.f32.mxu0 0.0
    %361 = vmatmul.mubr.f32.gmra.mrb[0].mxu0 %v129
    %v362 = vpop.f32.mrb[0].mxu0
    %v363 = vadd.f32 0.0, %v362
    %v364 = vpop.f32.mrb[0].mxu0
    %v365 = vadd.f32 0.0, %v364
    %366 = vmatprep.mubr.f32.mxu0 0.0
    %367 = vmatmul.mubr.f32.gmra.mrb[0].mxu0 %v132
    %v368 = vpop.f32.mrb[0].mxu0
    %v369 = vadd.f32 0.0, %v368
    %v370 = vpop.f32.mrb[0].mxu0
    %v371 = vadd.f32 0.0, %v370
    %372 = vmatprep.mubr.f32.mxu0 0.0
    %373 = vmatmul.mubr.f32.gmra.mrb[0].mxu0 %v135
    %v374 = vpop.f32.mrb[0].mxu0
    %v375 = vadd.f32 0.0, %v374
    %v376 = vpop.f32.mrb[0].mxu0
    %v377 = vadd.f32 0.0, %v376
    %378 = vmatprep.mubr.f32.mxu0 0.0
    %379 = vmatmul.mubr.f32.gmra.mrb[0].mxu0 %v138
    %v380 = vpop.f32.mrb[0].mxu0
    %v381 = vadd.f32 0.0, %v380
    %v382 = vpop.f32.mrb[0].mxu0
    %v383 = vadd.f32 0.0, %v382
    %384 = vmatprep.mubr.f32.mxu0 0.0
    %385 = vmatmul.mubr.f32.gmra.mrb[0].mxu0 %v141
    %v386 = vpop.f32.mrb[0].mxu0
    %v387 = vadd.f32 0.0, %v386
    %v388 = vpop.f32.mrb[0].mxu0
    %v389 = vadd.f32 0.0, %v388
    %390 = vmatprep.mubr.f32.mxu0 0.0
    %391 = vmatmul.mubr.f32.gmra.mrb[0].mxu0 %v144
    %v392 = vpop.f32.mrb[0].mxu0
    %v393 = vadd.f32 0.0, %v392
    %v394 = vpop.f32.mrb[0].mxu0
    %v395 = vadd.f32 0.0, %v394
    %396 = vmatprep.mubr.f32.mxu0 0.0
    %397 = vmatmul.mubr.f32.gmra.mrb[0].mxu0 %v147
    %v398 = vpop.f32.mrb[0].mxu0
    %v399 = vadd.f32 0.0, %v398
    %v400 = vpop.f32.mrb[0].mxu0
    %v401 = vadd.f32 0.0, %v400
    %402 = vmatprep.mubr.f32.mxu0 0.0
    %403 = vmatmul.mubr.f32.gmra.mrb[0].mxu0 %v150
    %v404 = vpop.f32.mrb[0].mxu0
    %v405 = vadd.f32 0.0, %v404
    %v406 = vpop.f32.mrb[0].mxu0
    %v407 = vadd.f32 0.0, %v406
    %408 = vdwg.mxu0
    %v409 = vxor.u32 %v219, 2147483648
    %v410 = vxor.u32 %v221, 2147483648
    %v411 = vxor.u32 %v225, 2147483648
    %v412 = vxor.u32 %v227, 2147483648
    %v413 = vxor.u32 %v231, 2147483648
    %v414 = vxor.u32 %v233, 2147483648
    %v415 = vxor.u32 %v237, 2147483648
    %v416 = vxor.u32 %v239, 2147483648
    %v417 = vxor.u32 %v243, 2147483648
    %v418 = vxor.u32 %v245, 2147483648
    %v419 = vxor.u32 %v249, 2147483648
    %v420 = vxor.u32 %v251, 2147483648
    %v421 = vxor.u32 %v255, 2147483648
    %v422 = vxor.u32 %v257, 2147483648
    %v423 = vxor.u32 %v261, 2147483648
    %v424 = vxor.u32 %v263, 2147483648
    %v425 = vxor.u32 %v267, 2147483648
    %v426 = vxor.u32 %v269, 2147483648
    %v427 = vxor.u32 %v273, 2147483648
    %v428 = vxor.u32 %v275, 2147483648
    %v429 = vxor.u32 %v279, 2147483648
    %v430 = vxor.u32 %v281, 2147483648
    %v431 = vxor.u32 %v285, 2147483648
    %v432 = vxor.u32 %v287, 2147483648
    %v433 = vxor.u32 %v291, 2147483648
    %v434 = vxor.u32 %v293, 2147483648
    %v435 = vxor.u32 %v297, 2147483648
    %v436 = vxor.u32 %v299, 2147483648
    %v437 = vxor.u32 %v303, 2147483648
    %v438 = vxor.u32 %v305, 2147483648
    %v439 = vxor.u32 %v309, 2147483648
    %v440 = vxor.u32 %v311, 2147483648
    %v441 = vxor.u32 %v315, 2147483648
    %v442 = vxor.u32 %v317, 2147483648
    %v443 = vxor.u32 %v321, 2147483648
    %v444 = vxor.u32 %v323, 2147483648
    %v445 = vxor.u32 %v327, 2147483648
    %v446 = vxor.u32 %v329, 2147483648
    %v447 = vxor.u32 %v333, 2147483648
    %v448 = vxor.u32 %v335, 2147483648
    %v449 = vxor.u32 %v339, 2147483648
    %v450 = vxor.u32 %v341, 2147483648
    %v451 = vxor.u32 %v345, 2147483648
    %v452 = vxor.u32 %v347, 2147483648
    %v453 = vxor.u32 %v351, 2147483648
    %v454 = vxor.u32 %v353, 2147483648
    %v455 = vxor.u32 %v357, 2147483648
    %v456 = vxor.u32 %v359, 2147483648
    %v457 = vxor.u32 %v363, 2147483648
    %v458 = vxor.u32 %v365, 2147483648
    %v459 = vxor.u32 %v369, 2147483648
    %v460 = vxor.u32 %v371, 2147483648
    %v461 = vxor.u32 %v375, 2147483648
    %v462 = vxor.u32 %v377, 2147483648
    %v463 = vxor.u32 %v381, 2147483648
    %v464 = vxor.u32 %v383, 2147483648
    %v465 = vxor.u32 %v387, 2147483648
    %v466 = vxor.u32 %v389, 2147483648
    %v467 = vxor.u32 %v393, 2147483648
    %v468 = vxor.u32 %v395, 2147483648
    %v469 = vxor.u32 %v399, 2147483648
    %v470 = vxor.u32 %v401, 2147483648
    %v471 = vxor.u32 %v405, 2147483648
    %v472 = vxor.u32 %v407, 2147483648
    %v473 = vmul.f32 %v409, 1.442695
    %v474 = vpow.pop %v473
    %v475 = vmul.f32 %v410, 1.442695
    %v476 = vpow.pop %v475
    %v477 = vmul.f32 %v411, 1.442695
    %v478 = vpow.pop %v477
    %v479 = vmul.f32 %v412, 1.442695
    %v480 = vpow.pop %v479
    %v481 = vmul.f32 %v413, 1.442695
    %v482 = vpow.pop %v481
    %v483 = vmul.f32 %v414, 1.442695
    %v484 = vpow.pop %v483
    %v485 = vmul.f32 %v415, 1.442695
    %v486 = vpow.pop %v485
    %v487 = vmul.f32 %v416, 1.442695
    %v488 = vpow.pop %v487
    %v489 = vmul.f32 %v417, 1.442695
    %v490 = vpow.pop %v489
    %v491 = vmul.f32 %v418, 1.442695
    %v492 = vpow.pop %v491
    %v493 = vmul.f32 %v419, 1.442695
    %v494 = vpow.pop %v493
    %v495 = vmul.f32 %v420, 1.442695
    %v496 = vpow.pop %v495
    %v497 = vmul.f32 %v421, 1.442695
    %v498 = vpow.pop %v497
    %v499 = vmul.f32 %v422, 1.442695
    %v500 = vpow.pop %v499
    %v501 = vmul.f32 %v423, 1.442695
    %v502 = vpow.pop %v501
    %v503 = vmul.f32 %v424, 1.442695
    %v504 = vpow.pop %v503
    %v505 = vmul.f32 %v425, 1.442695
    %v506 = vpow.pop %v505
    %v507 = vmul.f32 %v426, 1.442695
    %v508 = vpow.pop %v507
    %v509 = vmul.f32 %v427, 1.442695
    %v510 = vpow.pop %v509
    %v511 = vmul.f32 %v428, 1.442695
    %v512 = vpow.pop %v511
    %v513 = vmul.f32 %v429, 1.442695
    %v514 = vpow.pop %v513
    %v515 = vmul.f32 %v430, 1.442695
    %v516 = vpow.pop %v515
    %v517 = vmul.f32 %v431, 1.442695
    %v518 = vpow.pop %v517
    %v519 = vmul.f32 %v432, 1.442695
    %v520 = vpow.pop %v519
    %v521 = vmul.f32 %v433, 1.442695
    %v522 = vpow.pop %v521
    %v523 = vmul.f32 %v434, 1.442695
    %v524 = vpow.pop %v523
    %v525 = vmul.f32 %v435, 1.442695
    %v526 = vpow.pop %v525
    %v527 = vmul.f32 %v436, 1.442695
    %v528 = vpow.pop %v527
    %v529 = vmul.f32 %v437, 1.442695
    %v530 = vpow.pop %v529
    %v531 = vmul.f32 %v438, 1.442695
    %v532 = vpow.pop %v531
    %v533 = vmul.f32 %v439, 1.442695
    %v534 = vpow.pop %v533
    %v535 = vmul.f32 %v440, 1.442695
    %v536 = vpow.pop %v535
    %v537 = vmul.f32 %v441, 1.442695
    %v538 = vpow.pop %v537
    %v539 = vmul.f32 %v442, 1.442695
    %v540 = vpow.pop %v539
    %v541 = vmul.f32 %v443, 1.442695
    %v542 = vpow.pop %v541
    %v543 = vmul.f32 %v444, 1.442695
    %v544 = vpow.pop %v543
    %v545 = vmul.f32 %v445, 1.442695
    %v546 = vpow.pop %v545
    %v547 = vmul.f32 %v446, 1.442695
    %v548 = vpow.pop %v547
    %v549 = vmul.f32 %v447, 1.442695
    %v550 = vpow.pop %v549
    %v551 = vmul.f32 %v448, 1.442695
    %v552 = vpow.pop %v551
    %v553 = vmul.f32 %v449, 1.442695
    %v554 = vpow.pop %v553
    %v555 = vmul.f32 %v450, 1.442695
    %v556 = vpow.pop %v555
    %v557 = vmul.f32 %v451, 1.442695
    %v558 = vpow.pop %v557
    %v559 = vmul.f32 %v452, 1.442695
    %v560 = vpow.pop %v559
    %v561 = vmul.f32 %v453, 1.442695
    %v562 = vpow.pop %v561
    %v563 = vmul.f32 %v454, 1.442695
    %v564 = vpow.pop %v563
    %v565 = vmul.f32 %v455, 1.442695
    %v566 = vpow.pop %v565
    %v567 = vmul.f32 %v456, 1.442695
    %v568 = vpow.pop %v567
    %v569 = vmul.f32 %v457, 1.442695
    %v570 = vpow.pop %v569
    %v571 = vmul.f32 %v458, 1.442695
    %v572 = vpow.pop %v571
    %v573 = vmul.f32 %v459, 1.442695
    %v574 = vpow.pop %v573
    %v575 = vmul.f32 %v460, 1.442695
    %v576 = vpow.pop %v575
    %v577 = vmul.f32 %v461, 1.442695
    %v578 = vpow.pop %v577
    %v579 = vmul.f32 %v462, 1.442695
    %v580 = vpow.pop %v579
    %v581 = vmul.f32 %v463, 1.442695
    %v582 = vpow.pop %v581
    %v583 = vmul.f32 %v464, 1.442695
    %v584 = vpow.pop %v583
    %v585 = vmul.f32 %v465, 1.442695
    %v586 = vpow.pop %v585
    %v587 = vmul.f32 %v466, 1.442695
    %v588 = vpow.pop %v587
    %v589 = vmul.f32 %v467, 1.442695
    %v590 = vpow.pop %v589
    %v591 = vmul.f32 %v468, 1.442695
    %v592 = vpow.pop %v591
    %v593 = vmul.f32 %v469, 1.442695
    %v594 = vpow.pop %v593
    %v595 = vmul.f32 %v470, 1.442695
    %v596 = vpow.pop %v595
    %v597 = vmul.f32 %v471, 1.442695
    %v598 = vpow.pop %v597
    %v599 = vmul.f32 %v472, 1.442695
    %v600 = vpow.pop %v599
    %v601 = vadd.f32 %v474, 1.0
    %v602 = vadd.f32 %v476, 1.0
    %v603 = vadd.f32 %v478, 1.0
    %v604 = vadd.f32 %v480, 1.0
    %v605 = vadd.f32 %v482, 1.0
    %v606 = vadd.f32 %v484, 1.0
    %v607 = vadd.f32 %v486, 1.0
    %v608 = vadd.f32 %v488, 1.0
    %v609 = vadd.f32 %v490, 1.0
    %v610 = vadd.f32 %v492, 1.0
    %v611 = vadd.f32 %v494, 1.0
    %v612 = vadd.f32 %v496, 1.0
    %v613 = vadd.f32 %v498, 1.0
    %v614 = vadd.f32 %v500, 1.0
    %v615 = vadd.f32 %v502, 1.0
    %v616 = vadd.f32 %v504, 1.0
    %v617 = vadd.f32 %v506, 1.0
    %v618 = vadd.f32 %v508, 1.0
    %v619 = vadd.f32 %v510, 1.0
    %v620 = vadd.f32 %v512, 1.0
    %v621 = vadd.f32 %v514, 1.0
    %v622 = vadd.f32 %v516, 1.0
    %v623 = vadd.f32 %v518, 1.0
    %v624 = vadd.f32 %v520, 1.0
    %v625 = vadd.f32 %v522, 1.0
    %v626 = vadd.f32 %v524, 1.0
    %v627 = vadd.f32 %v526, 1.0
    %v628 = vadd.f32 %v528, 1.0
    %v629 = vadd.f32 %v530, 1.0
    %v630 = vadd.f32 %v532, 1.0
    %v631 = vadd.f32 %v534, 1.0
    %v632 = vadd.f32 %v536, 1.0
    %v633 = vadd.f32 %v538, 1.0
    %v634 = vadd.f32 %v540, 1.0
    %v635 = vadd.f32 %v542, 1.0
    %v636 = vadd.f32 %v544, 1.0
    %v637 = vadd.f32 %v546, 1.0
    %v638 = vadd.f32 %v548, 1.0
    %v639 = vadd.f32 %v550, 1.0
    %v640 = vadd.f32 %v552, 1.0
    %v641 = vadd.f32 %v554, 1.0
    %v642 = vadd.f32 %v556, 1.0
    %v643 = vadd.f32 %v558, 1.0
    %v644 = vadd.f32 %v560, 1.0
    %v645 = vadd.f32 %v562, 1.0
    %v646 = vadd.f32 %v564, 1.0
    %v647 = vadd.f32 %v566, 1.0
    %v648 = vadd.f32 %v568, 1.0
    %v649 = vadd.f32 %v570, 1.0
    %v650 = vadd.f32 %v572, 1.0
    %v651 = vadd.f32 %v574, 1.0
    %v652 = vadd.f32 %v576, 1.0
    %v653 = vadd.f32 %v578, 1.0
    %v654 = vadd.f32 %v580, 1.0
    %v655 = vadd.f32 %v582, 1.0
    %v656 = vadd.f32 %v584, 1.0
    %v657 = vadd.f32 %v586, 1.0
    %v658 = vadd.f32 %v588, 1.0
    %v659 = vadd.f32 %v590, 1.0
    %v660 = vadd.f32 %v592, 1.0
    %v661 = vadd.f32 %v594, 1.0
    %v662 = vadd.f32 %v596, 1.0
    %v663 = vadd.f32 %v598, 1.0
    %v664 = vadd.f32 %v600, 1.0
    %v665 = vrcp.pop %v601
    %v666 = vmul.f32 1.0, %v665
    %v667 = vrcp.pop %v602
    %v668 = vmul.f32 1.0, %v667
    %v669 = vrcp.pop %v603
    %v670 = vmul.f32 1.0, %v669
    %v671 = vrcp.pop %v604
    %v672 = vmul.f32 1.0, %v671
    %v673 = vrcp.pop %v605
    %v674 = vmul.f32 1.0, %v673
    %v675 = vrcp.pop %v606
    %v676 = vmul.f32 1.0, %v675
    %v677 = vrcp.pop %v607
    %v678 = vmul.f32 1.0, %v677
    %v679 = vrcp.pop %v608
    %v680 = vmul.f32 1.0, %v679
    %v681 = vrcp.pop %v609
    %v682 = vmul.f32 1.0, %v681
    %v683 = vrcp.pop %v610
    %v684 = vmul.f32 1.0, %v683
    %v685 = vrcp.pop %v611
    %v686 = vmul.f32 1.0, %v685
    %v687 = vrcp.pop %v612
    %v688 = vmul.f32 1.0, %v687
    %v689 = vrcp.pop %v613
    %v690 = vmul.f32 1.0, %v689
    %v691 = vrcp.pop %v614
    %v692 = vmul.f32 1.0, %v691
    %v693 = vrcp.pop %v615
    %v694 = vmul.f32 1.0, %v693
    %v695 = vrcp.pop %v616
    %v696 = vmul.f32 1.0, %v695
    %v697 = vrcp.pop %v617
    %v698 = vmul.f32 1.0, %v697
    %v699 = vrcp.pop %v618
    %v700 = vmul.f32 1.0, %v699
    %v701 = vrcp.pop %v619
    %v702 = vmul.f32 1.0, %v701
    %v703 = vrcp.pop %v620
    %v704 = vmul.f32 1.0, %v703
    %v705 = vrcp.pop %v621
    %v706 = vmul.f32 1.0, %v705
    %v707 = vrcp.pop %v622
    %v708 = vmul.f32 1.0, %v707
    %v709 = vrcp.pop %v623
    %v710 = vmul.f32 1.0, %v709
    %v711 = vrcp.pop %v624
    %v712 = vmul.f32 1.0, %v711
    %v713 = vrcp.pop %v625
    %v714 = vmul.f32 1.0, %v713
    %v715 = vrcp.pop %v626
    %v716 = vmul.f32 1.0, %v715
    %v717 = vrcp.pop %v627
    %v718 = vmul.f32 1.0, %v717
    %v719 = vrcp.pop %v628
    %v720 = vmul.f32 1.0, %v719
    %v721 = vrcp.pop %v629
    %v722 = vmul.f32 1.0, %v721
    %v723 = vrcp.pop %v630
    %v724 = vmul.f32 1.0, %v723
    %v725 = vrcp.pop %v631
    %v726 = vmul.f32 1.0, %v725
    %v727 = vrcp.pop %v632
    %v728 = vmul.f32 1.0, %v727
    %v729 = vrcp.pop %v633
    %v730 = vmul.f32 1.0, %v729
    %v731 = vrcp.pop %v634
    %v732 = vmul.f32 1.0, %v731
    %v733 = vrcp.pop %v635
    %v734 = vmul.f32 1.0, %v733
    %v735 = vrcp.pop %v636
    %v736 = vmul.f32 1.0, %v735
    %v737 = vrcp.pop %v637
    %v738 = vmul.f32 1.0, %v737
    %v739 = vrcp.pop %v638
    %v740 = vmul.f32 1.0, %v739
    %v741 = vrcp.pop %v639
    %v742 = vmul.f32 1.0, %v741
    %v743 = vrcp.pop %v640
    %v744 = vmul.f32 1.0, %v743
    %v745 = vrcp.pop %v641
    %v746 = vmul.f32 1.0, %v745
    %v747 = vrcp.pop %v642
    %v748 = vmul.f32 1.0, %v747
    %v749 = vrcp.pop %v643
    %v750 = vmul.f32 1.0, %v749
    %v751 = vrcp.pop %v644
    %v752 = vmul.f32 1.0, %v751
    %v753 = vrcp.pop %v645
    %v754 = vmul.f32 1.0, %v753
    %v755 = vrcp.pop %v646
    %v756 = vmul.f32 1.0, %v755
    %v757 = vrcp.pop %v647
    %v758 = vmul.f32 1.0, %v757
    %v759 = vrcp.pop %v648
    %v760 = vmul.f32 1.0, %v759
    %v761 = vrcp.pop %v649
    %v762 = vmul.f32 1.0, %v761
    %v763 = vrcp.pop %v650
    %v764 = vmul.f32 1.0, %v763
    %v765 = vrcp.pop %v651
    %v766 = vmul.f32 1.0, %v765
    %v767 = vrcp.pop %v652
    %v768 = vmul.f32 1.0, %v767
    %v769 = vrcp.pop %v653
    %v770 = vmul.f32 1.0, %v769
    %v771 = vrcp.pop %v654
    %v772 = vmul.f32 1.0, %v771
    %v773 = vrcp.pop %v655
    %v774 = vmul.f32 1.0, %v773
    %v775 = vrcp.pop %v656
    %v776 = vmul.f32 1.0, %v775
    %v777 = vrcp.pop %v657
    %v778 = vmul.f32 1.0, %v777
    %v779 = vrcp.pop %v658
    %v780 = vmul.f32 1.0, %v779
    %v781 = vrcp.pop %v659
    %v782 = vmul.f32 1.0, %v781
    %v783 = vrcp.pop %v660
    %v784 = vmul.f32 1.0, %v783
    %v785 = vrcp.pop %v661
    %v786 = vmul.f32 1.0, %v785
    %v787 = vrcp.pop %v662
    %v788 = vmul.f32 1.0, %v787
    %v789 = vrcp.pop %v663
    %v790 = vmul.f32 1.0, %v789
    %v791 = vrcp.pop %v664
    %v792 = vmul.f32 1.0, %v791
    %793 = vst [vmem:[#allocation2] sm:$0xff] %v666
    %794 = vst [vmem:[#allocation2 + $0x8] sm:$0xff] %v668
    %795 = vst [vmem:[#allocation2 + $0x10] sm:$0xff] %v670
    %796 = vst [vmem:[#allocation2 + $0x18] sm:$0xff] %v672
    %797 = vst [vmem:[#allocation2 + $0x20] sm:$0xff] %v674
    %798 = vst [vmem:[#allocation2 + $0x28] sm:$0xff] %v676
    %799 = vst [vmem:[#allocation2 + $0x30] sm:$0xff] %v678
    %800 = vst [vmem:[#allocation2 + $0x38] sm:$0xff] %v680
    %801 = vst [vmem:[#allocation2 + $0x40] sm:$0xff] %v682
    %802 = vst [vmem:[#allocation2 + $0x48] sm:$0xff] %v684
    %803 = vst [vmem:[#allocation2 + $0x50] sm:$0xff] %v686
    %804 = vst [vmem:[#allocation2 + $0x58] sm:$0xff] %v688
    %805 = vst [vmem:[#allocation2 + $0x60] sm:$0xff] %v690
    %806 = vst [vmem:[#allocation2 + $0x68] sm:$0xff] %v692
    %807 = vst [vmem:[#allocation2 + $0x70] sm:$0xff] %v694
    %808 = vst [vmem:[#allocation2 + $0x78] sm:$0xff] %v696
    %809 = vst [vmem:[#allocation2 + $0x80] sm:$0xff] %v698
    %810 = vst [vmem:[#allocation2 + $0x88] sm:$0xff] %v700
    %811 = vst [vmem:[#allocation2 + $0x90] sm:$0xff] %v702
    %812 = vst [vmem:[#allocation2 + $0x98] sm:$0xff] %v704
    %813 = vst [vmem:[#allocation2 + $0xa0] sm:$0xff] %v706
    %814 = vst [vmem:[#allocation2 + $0xa8] sm:$0xff] %v708
    %815 = vst [vmem:[#allocation2 + $0xb0] sm:$0xff] %v710
    %816 = vst [vmem:[#allocation2 + $0xb8] sm:$0xff] %v712
    %817 = vst [vmem:[#allocation2 + $0xc0] sm:$0xff] %v714
    %818 = vst [vmem:[#allocation2 + $0xc8] sm:$0xff] %v716
    %819 = vst [vmem:[#allocation2 + $0xd0] sm:$0xff] %v718
    %820 = vst [vmem:[#allocation2 + $0xd8] sm:$0xff] %v720
    %821 = vst [vmem:[#allocation2 + $0xe0] sm:$0xff] %v722
    %822 = vst [vmem:[#allocation2 + $0xe8] sm:$0xff] %v724
    %823 = vst [vmem:[#allocation2 + $0xf0] sm:$0xff] %v726
    %824 = vst [vmem:[#allocation2 + $0xf8] sm:$0xff] %v728
    %825 = vst [vmem:[#allocation2 + $0x100] sm:$0xff] %v730
    %826 = vst [vmem:[#allocation2 + $0x108] sm:$0xff] %v732
    %827 = vst [vmem:[#allocation2 + $0x110] sm:$0xff] %v734
    %828 = vst [vmem:[#allocation2 + $0x118] sm:$0xff] %v736
    %829 = vst [vmem:[#allocation2 + $0x120] sm:$0xff] %v738
    %830 = vst [vmem:[#allocation2 + $0x128] sm:$0xff] %v740
    %831 = vst [vmem:[#allocation2 + $0x130] sm:$0xff] %v742
    %832 = vst [vmem:[#allocation2 + $0x138] sm:$0xff] %v744
    %833 = vst [vmem:[#allocation2 + $0x140] sm:$0xff] %v746
    %834 = vst [vmem:[#allocation2 + $0x148] sm:$0xff] %v748
    %835 = vst [vmem:[#allocation2 + $0x150] sm:$0xff] %v750
    %836 = vst [vmem:[#allocation2 + $0x158] sm:$0xff] %v752
    %837 = vst [vmem:[#allocation2 + $0x160] sm:$0xff] %v754
    %838 = vst [vmem:[#allocation2 + $0x168] sm:$0xff] %v756
    %839 = vst [vmem:[#allocation2 + $0x170] sm:$0xff] %v758
    %840 = vst [vmem:[#allocation2 + $0x178] sm:$0xff] %v760
    %841 = vst [vmem:[#allocation2 + $0x180] sm:$0xff] %v762
    %842 = vst [vmem:[#allocation2 + $0x188] sm:$0xff] %v764
    %843 = vst [vmem:[#allocation2 + $0x190] sm:$0xff] %v766
    %844 = vst [vmem:[#allocation2 + $0x198] sm:$0xff] %v768
    %845 = vst [vmem:[#allocation2 + $0x1a0] sm:$0xff] %v770
    %846 = vst [vmem:[#allocation2 + $0x1a8] sm:$0xff] %v772
    %847 = vst [vmem:[#allocation2 + $0x1b0] sm:$0xff] %v774
    %848 = vst [vmem:[#allocation2 + $0x1b8] sm:$0xff] %v776
    %849 = vst [vmem:[#allocation2 + $0x1c0] sm:$0xff] %v778
    %850 = vst [vmem:[#allocation2 + $0x1c8] sm:$0xff] %v780
    %851 = vst [vmem:[#allocation2 + $0x1d0] sm:$0xff] %v782
    %852 = vst [vmem:[#allocation2 + $0x1d8] sm:$0xff] %v784
    %853 = vst [vmem:[#allocation2 + $0x1e0] sm:$0xff] %v786
    %854 = vst [vmem:[#allocation2 + $0x1e8] sm:$0xff] %v788
    %855 = vst [vmem:[#allocation2 + $0x1f0] sm:$0xff] %v790
    %856 = vst [vmem:[#allocation2 + $0x1f8] sm:$0xff] %v792
    // Predicated region
    $region10: #{inner_product_decoder.1} parent=1 // pred_check
      _
    $region11: #{inner_product_decoder.1} parent=1 // pred_check_branch
      %858 = sbr.rel (0) target = $region13
    $region12: #{inner_product_decoder.1} parent=1 // pred_region
      %s860 = ssub.s32 8192, 8192
      %861 = vsyncadd [#allocation3], %s860
      %s862 = sshll.u32 [#allocation2], 4
      %s863 = int_to_ptr.vmem [resolvable:$true] %s862
      %868 = dma.vmem_to_hbm [thread:$0]  %s863, 8192, %s2, [#allocation3], 256, 256, 16
    $region13: #{inner_product_decoder.1} parent=1 // pred_fallthru
      _
    // Predicated region
    $region14: #{inner_product_decoder.1} parent=1 // pred_check
      _
    $region15: #{inner_product_decoder.1} parent=1 // pred_check_branch
      %870 = sbr.rel (0) target = $region17
    $region16: #{inner_product_decoder.1} parent=1 // pred_region
      %871 = dma.done [#allocation3], 8192
    $region17: #{inner_product_decoder.1} parent=1 // pred_fallthru
      _
    %872 = vsyncpa [#allocation3], 1

</llo_original>
